<compile_context>
chip_gen: v7x
topology: tpu7x:2x2x1
jax: 0.10.0
libtpu: 0.0.40
codegen_flags: <defaults>
</compile_context>

<pallas_src>
import functools

import numpy as np

import jax
import jax.numpy as jnp
from jax.experimental import pallas as pl
from jax.experimental.pallas import tpu as pltpu


# ----------------------------------------------------------------------------
# Pallas kernel.
#   un-folded (L == D):  out = x*cos + roll(x, D/2)*sin_signed
#   folded    (L = m*D): out = x*cos + roll(x,+D/2)*sin_lo + roll(x,-D/2)*sin_hi
# sin_lo is (-sin) masked to the first half of each head, sin_hi is (+sin) masked
# to the second half, so cross-head garbage from the circular rolls is multiplied
# by exactly 0 and the result equals x*cos + rotate_half(x)*sin per head.
# ----------------------------------------------------------------------------
def _rope_kernel(q_ref, k_ref, coeff_ref, qo_ref, ko_ref, *,
                 half, lanes, folded, compute_dtype):
    cos = coeff_ref[:, 0:1, :]                        # (ts, 1, L), bcast over group
    if folded:
        sin_lo = coeff_ref[:, 1:2, :]                 # -sin on first half of each head
        sin_hi = coeff_ref[:, 2:3, :]                 # +sin on second half
    else:
        sin_signed = coeff_ref[:, 1:2, :]             # [-sin | +sin] single stream

    def apply(x_ref, o_ref):
        x = x_ref[...]
        if x.dtype != compute_dtype:
            x = x.astype(compute_dtype)
        x_minus = pltpu.roll(x, half, 2)              # x[.., l - D/2]  (XLU, cheap)
        if folded:
            x_plus = pltpu.roll(x, lanes - half, 2)   # x[.., l + D/2]
            out = x * cos + x_plus * sin_lo + x_minus * sin_hi
        else:
            # circular roll by D/2 brings x[l+D/2] for the first half (wrap) and
            # x[l-D/2] for the second half; the sign lives in sin_signed.
            out = x * cos + x_minus * sin_signed
        o_ref[...] = out.astype(o_ref.dtype)

    apply(q_ref, qo_ref)
    apply(k_ref, ko_ref)


# ----------------------------------------------------------------------------
# Coefficient cache (mirrors RotarySanityCheck._get_cos_sin, seq_dim == 0),
# with rotate_half's sign folded into the sin rows.  Built host-side in numpy
# (cheap, hash-cacheable, no tracer leakage); cast to the compute dtype on use.
# ----------------------------------------------------------------------------
@functools.lru_cache(maxsize=16)
def _build_coeffs_np(seq_len: int, dim: int, fold: int, base: float):
    half = dim // 2
    inv_freq = 1.0 / (base ** (np.arange(0, dim, 2, dtype=np.float32) / dim))
    t = np.arange(seq_len, dtype=np.float32)
    freqs = t[:, None] * inv_freq[None, :]            # (S, D/2)
    cos_f = np.cos(freqs)
    sin_f = np.sin(freqs)
    cos = np.concatenate([cos_f, cos_f], axis=-1)      # (S, D)
    if fold == 1:
        sin_signed = np.concatenate([-sin_f, sin_f], axis=-1)
        rows = [cos, sin_signed]                       # 2 streams, single-roll path
    else:
        zeros = np.zeros_like(sin_f)
        sin_lo = np.concatenate([-sin_f, zeros], axis=-1)
        sin_hi = np.concatenate([zeros, sin_f], axis=-1)
        rows = [np.tile(cos, (1, fold)),
                np.tile(sin_lo, (1, fold)),
                np.tile(sin_hi, (1, fold))]            # 3 streams, two-roll path
    return np.stack(rows, axis=1).astype(np.float32)   # (S, nrows, L)


def _pick_fold(bh: int, dim: int) -> int:
    """Smallest m | (B*H) with (m*dim) % 128 == 0 -> lane-dense, max group dim."""
    for m in range(1, bh + 1):
        if bh % m == 0 and (m * dim) % 128 == 0:
            return m
    # TODO(synk): no fold yields a 128-multiple lane dim; fall back to the widest
    # >=128-lane layout (accepts vst.msk partial stores) instead of padding lanes.
    for m in range(1, bh + 1):
        if bh % m == 0 and m * dim >= 128:
            return m
    return bh


def _num_tensorcores() -> int:
    """Best-effort TC-per-device count (v7x / v4 / v5p megacore => 2, else 1)."""
    try:
        kind = jax.devices()[0].device_kind.lower()
    except Exception:
        return 1
    return 2 if any(tag in kind for tag in ("v7", "v4", "v5p")) else 1


# ----------------------------------------------------------------------------
# Wrapper — equivalent of RotarySanityCheck.forward (seq_dim = 0).
# ----------------------------------------------------------------------------
def rotary_forward(query_layer, key_layer, base: float = 10000.0):
    S, B, H, D = query_layer.shape
    assert key_layer.shape == (S, B, H, D), "query/key shapes must match"
    assert query_layer.dtype == key_layer.dtype, "query/key dtypes must match"
    assert D % 2 == 0, "head_dim must be even for rotary embeddings"
    half = D // 2

    in_dtype = query_layer.dtype
    compute_dtype = jnp.bfloat16 if in_dtype == jnp.bfloat16 else jnp.float32

    # Minimal head folding: (S, B, H, D) -> (S, G, L) with L = fold*D % 128 == 0.
    bh = B * H
    fold = _pick_fold(bh, D)
    G = bh // fold
    L = fold * D
    folded = fold > 1

    q3 = query_layer.reshape(S, G, L)
    k3 = key_layer.reshape(S, G, L)

    coeff = jnp.asarray(_build_coeffs_np(S, D, fold, float(base)),
                        dtype=compute_dtype)          # (S, nrows, L)
    n_rows = coeff.shape[1]

    # ----- seq tiling: biggest ~1 MiB blocks (>=85% of HBM roofline) ---------
    itemsize = jnp.dtype(in_dtype).itemsize
    row_bytes = G * L * itemsize
    target_block_bytes = 1 << 20
    ts = max(1, min(S, target_block_bytes // max(row_bytes, 1)))
    n_tiles = pl.cdiv(S, ts)

    # Multi-TC chips only: round the tile count up to a multiple of the TC count
    # so no core idles; never shrink blocks below ~512 KiB unless a core would
    # otherwise sit idle.  Single-TC v5e/v6e keep the fewest, largest tiles.
    n_tc = _num_tensorcores()
    if n_tc > 1 and S > 1:
        want = max(n_tc, -(-n_tiles // n_tc) * n_tc)
        if want != n_tiles:
            ts_new = -(-S // want)
            if ts_new * row_bytes >= (512 << 10) or n_tiles < n_tc:
                ts = ts_new
                n_tiles = pl.cdiv(S, ts)
    grid = (n_tiles,)

    qk_spec = pl.BlockSpec((ts, G, L), lambda i: (i, 0, 0))
    cf_spec = pl.BlockSpec((ts, n_rows, L), lambda i: (i, 0, 0))

    # ----- VMEM budget derived from the actual block sizes -------------------
    coeff_itemsize = jnp.dtype(compute_dtype).itemsize
    block_bytes = ts * G * L * itemsize
    coeff_block_bytes = ts * 8 * L * coeff_itemsize    # sublane-padded to 8 rows
    vmem_need = 2 * (4 * block_bytes + coeff_block_bytes)  # dbl-buffered q/k in+out
    vmem_limit = int(min(max(2 * vmem_need + (4 << 20), 16 << 20), 64 << 20))

    nelem = S * G * L
    ops_per_elem = 5 if folded else 3
    cost = pl.CostEstimate(
        flops=2 * ops_per_elem * nelem,                # q and k
        transcendentals=0,
        bytes_accessed=4 * nelem * itemsize + coeff.size * coeff_itemsize,
    )

    kernel = functools.partial(
        _rope_kernel, half=half, lanes=L, folded=folded, compute_dtype=compute_dtype)

    out_shape = (
        jax.ShapeDtypeStruct((S, G, L), in_dtype),
        jax.ShapeDtypeStruct((S, G, L), in_dtype),
    )

    q_out, k_out = pl.pallas_call(
        kernel,
        out_shape=out_shape,
        grid_spec=pltpu.PrefetchScalarGridSpec(
            num_scalar_prefetch=0,
            grid=grid,
            in_specs=[qk_spec, qk_spec, cf_spec],
            out_specs=[qk_spec, qk_spec],
        ),
        compiler_params=pltpu.CompilerParams(
            dimension_semantics=("parallel",),
            vmem_limit_bytes=vmem_limit,
        ),
        cost_estimate=cost,
    )(q3, k3, coeff)

    return q_out.reshape(S, B, H, D), k_out.reshape(S, B, H, D)


# ----------------------------------------------------------------------------
# Pure-JAX reference (mirrors the PyTorch module exactly) for correctness.
# ----------------------------------------------------------------------------
def _rotary_ref(q, k, base=10000.0):
    S, B, H, D = q.shape
    inv_freq = 1.0 / (base ** (jnp.arange(0, D, 2, dtype=jnp.float32) / D))
    t = jnp.arange(S, dtype=jnp.float32)
    freqs = jnp.einsum("i,j->ij", t, inv_freq)
    emb = jnp.concatenate([freqs, freqs], axis=-1)
    cos = jnp.cos(emb)[:, None, None, :]
    sin = jnp.sin(emb)[:, None, None, :]

    def rotate_half(x):
        x1, x2 = x[..., : D // 2], x[..., D // 2:]
        return jnp.concatenate([-x2, x1], axis=-1)

    return q * cos + rotate_half(q) * sin, k * cos + rotate_half(k) * sin


if __name__ == "__main__":
    # Small shapes implied by the module: seq=8, batch=2, heads=4, head_dim=32
    S, B, H, D = 8, 2, 4, 32
    key = jax.random.PRNGKey(0)
    kq, kk = jax.random.split(key)
    q = jax.random.normal(kq, (S, B, H, D), dtype=jnp.float32)
    k = jax.random.normal(kk, (S, B, H, D), dtype=jnp.float32)

    q_out, k_out = rotary_forward(q, k)
    q_out = jax.block_until_ready(q_out)
    k_out = jax.block_until_ready(k_out)

    q_ref, k_ref = _rotary_ref(q, k)
    assert jnp.allclose(q_out, q_ref, atol=1e-5, rtol=1e-5)
    assert jnp.allclose(k_out, k_ref, atol=1e-5, rtol=1e-5)

    print("KERNEL_OK")
</pallas_src>

<mosaic_0001>
module attributes {stable_mosaic.version = 11 : i64} {
  func.func @_rope_kernel(%arg0: i32, %arg1: memref<8x2x128xf32, #tpu.memory_space<vmem>>, %arg2: memref<8x2x128xf32, #tpu.memory_space<vmem>>, %arg3: memref<8x3x128xf32, #tpu.memory_space<vmem>>, %arg4: memref<8x2x128xf32, #tpu.memory_space<vmem>>, %arg5: memref<8x2x128xf32, #tpu.memory_space<vmem>>) attributes {dimension_semantics = [#tpu.dimension_semantics<parallel>], iteration_bounds = array<i64: 1>, scalar_prefetch = 0 : i64, scratch_operands = 0 : i64, tpu.core_type = #tpu.core_type<tc>, window_params = [{transform_indices = @transform_0, window_bounds = array<i64: 8, 2, 128>}, {transform_indices = @transform_1, window_bounds = array<i64: 8, 2, 128>}, {transform_indices = @transform_2, window_bounds = array<i64: 8, 3, 128>}, {transform_indices = @transform_3, window_bounds = array<i64: 8, 2, 128>}, {transform_indices = @transform_4, window_bounds = array<i64: 8, 2, 128>}]} {
    %c0 = arith.constant 0 : index
    %c0_0 = arith.constant 0 : index
    %c0_1 = arith.constant 0 : index
    %0 = vector.load %arg3[%c0, %c0_0, %c0_1] : memref<8x3x128xf32, #tpu.memory_space<vmem>>, vector<8x1x128xf32>
    %c0_2 = arith.constant 0 : index
    %c1 = arith.constant 1 : index
    %c0_3 = arith.constant 0 : index
    %1 = vector.load %arg3[%c0_2, %c1, %c0_3] : memref<8x3x128xf32, #tpu.memory_space<vmem>>, vector<8x1x128xf32>
    %c0_4 = arith.constant 0 : index
    %c2 = arith.constant 2 : index
    %c0_5 = arith.constant 0 : index
    %2 = vector.load %arg3[%c0_4, %c2, %c0_5] : memref<8x3x128xf32, #tpu.memory_space<vmem>>, vector<8x1x128xf32>
    %c0_6 = arith.constant 0 : index
    %c0_7 = arith.constant 0 : index
    %c0_8 = arith.constant 0 : index
    %3 = vector.load %arg1[%c0_6, %c0_7, %c0_8] : memref<8x2x128xf32, #tpu.memory_space<vmem>>, vector<8x2x128xf32>
    %c16_i32 = arith.constant 16 : i32
    %4 = tpu.dynamic_rotate %3 by %c16_i32 dim 2 : vector<8x2x128xf32>, i32 -> vector<8x2x128xf32>
    %c112_i32 = arith.constant 112 : i32
    %5 = tpu.dynamic_rotate %3 by %c112_i32 dim 2 : vector<8x2x128xf32>, i32 -> vector<8x2x128xf32>
    %6 = vector.broadcast %0 : vector<8x1x128xf32> to vector<8x2x128xf32>
    %7 = arith.mulf %3, %6 : vector<8x2x128xf32>
    %8 = vector.broadcast %1 : vector<8x1x128xf32> to vector<8x2x128xf32>
    %9 = arith.mulf %5, %8 : vector<8x2x128xf32>
    %10 = arith.addf %7, %9 : vector<8x2x128xf32>
    %11 = vector.broadcast %2 : vector<8x1x128xf32> to vector<8x2x128xf32>
    %12 = arith.mulf %4, %11 : vector<8x2x128xf32>
    %13 = arith.addf %10, %12 : vector<8x2x128xf32>
    %c0_9 = arith.constant 0 : index
    %c0_10 = arith.constant 0 : index
    %c0_11 = arith.constant 0 : index
    %14 = vector.load %arg4[%c0_9, %c0_10, %c0_11] : memref<8x2x128xf32, #tpu.memory_space<vmem>>, vector<8x2x128xf32>
    tpu.vector_store %arg4[%c0_9, %c0_10, %c0_11], %13 {strides = array<i32>} : memref<8x2x128xf32, #tpu.memory_space<vmem>>, vector<8x2x128xf32>,
    %c0_12 = arith.constant 0 : index
    %c0_13 = arith.constant 0 : index
    %c0_14 = arith.constant 0 : index
    %15 = vector.load %arg2[%c0_12, %c0_13, %c0_14] : memref<8x2x128xf32, #tpu.memory_space<vmem>>, vector<8x2x128xf32>
    %c16_i32_15 = arith.constant 16 : i32
    %16 = tpu.dynamic_rotate %15 by %c16_i32_15 dim 2 : vector<8x2x128xf32>, i32 -> vector<8x2x128xf32>
    %c112_i32_16 = arith.constant 112 : i32
    %17 = tpu.dynamic_rotate %15 by %c112_i32_16 dim 2 : vector<8x2x128xf32>, i32 -> vector<8x2x128xf32>
    %18 = vector.broadcast %0 : vector<8x1x128xf32> to vector<8x2x128xf32>
    %19 = arith.mulf %15, %18 : vector<8x2x128xf32>
    %20 = vector.broadcast %1 : vector<8x1x128xf32> to vector<8x2x128xf32>
    %21 = arith.mulf %17, %20 : vector<8x2x128xf32>
    %22 = arith.addf %19, %21 : vector<8x2x128xf32>
    %23 = vector.broadcast %2 : vector<8x1x128xf32> to vector<8x2x128xf32>
    %24 = arith.mulf %16, %23 : vector<8x2x128xf32>
    %25 = arith.addf %22, %24 : vector<8x2x128xf32>
    %c0_17 = arith.constant 0 : index
    %c0_18 = arith.constant 0 : index
    %c0_19 = arith.constant 0 : index
    %26 = vector.load %arg5[%c0_17, %c0_18, %c0_19] : memref<8x2x128xf32, #tpu.memory_space<vmem>>, vector<8x2x128xf32>
    tpu.vector_store %arg5[%c0_17, %c0_18, %c0_19], %25 {strides = array<i32>} : memref<8x2x128xf32, #tpu.memory_space<vmem>>, vector<8x2x128xf32>,
    return
  }
  func.func @transform_0(%arg0: i32) -> (i32, i32, i32) {
    %c0_i32 = arith.constant 0 : i32
    %c0_i32_0 = arith.constant 0 : i32
    %c0_i32_1 = arith.constant 0 : i32
    return %arg0, %c0_i32, %c0_i32_0 : i32, i32, i32
  }
  func.func @transform_1(%arg0: i32) -> (i32, i32, i32) {
    %c0_i32 = arith.constant 0 : i32
    %c0_i32_0 = arith.constant 0 : i32
    %c0_i32_1 = arith.constant 0 : i32
    return %arg0, %c0_i32, %c0_i32_0 : i32, i32, i32
  }
  func.func @transform_2(%arg0: i32) -> (i32, i32, i32) {
    %c0_i32 = arith.constant 0 : i32
    %c0_i32_0 = arith.constant 0 : i32
    %c0_i32_1 = arith.constant 0 : i32
    return %arg0, %c0_i32, %c0_i32_0 : i32, i32, i32
  }
  func.func @transform_3(%arg0: i32) -> (i32, i32, i32) {
    %c0_i32 = arith.constant 0 : i32
    %c0_i32_0 = arith.constant 0 : i32
    %c0_i32_1 = arith.constant 0 : i32
    return %arg0, %c0_i32, %c0_i32_0 : i32, i32, i32
  }
  func.func @transform_4(%arg0: i32) -> (i32, i32, i32) {
    %c0_i32 = arith.constant 0 : i32
    %c0_i32_0 = arith.constant 0 : i32
    %c0_i32_1 = arith.constant 0 : i32
    return %arg0, %c0_i32, %c0_i32_0 : i32, i32, i32
  }
}

</mosaic_0001>

<llo_original>
// kernel: tpu_custom_call.1
$region0: #{tpu_custom_call.1}
  #allocation0 [shape = 'u32[]', space=smem, size = 0x4, offset = 0x4, fixed_abs, tag = 'smem constant byte address 0x4 - core index']
  #allocation1 [shape = 'u32[144,128]{1,0:T(1,128)}', space=vmem, size = 0x12000, scoped, tag = 'internal scratch']
  %s0 = inlined_call_operand.vmem [shape: f32[8,2,128], index: 0, kind: input, shape index: {}]
  %s1 = inlined_call_operand.vmem [shape: f32[8,2,128], index: 1, kind: input, shape index: {}]
  %s2 = inlined_call_operand.vmem [shape: f32[8,3,128], index: 2, kind: input, shape index: {}]
  %s3 = inlined_call_operand.hbm [shape: f32[8,2,128], index: 3, kind: output, shape index: {0}]
  %s4 = inlined_call_operand.hbm [shape: f32[8,2,128], index: 4, kind: output, shape index: {1}]
  %5 = xla_tuple %s3, %s4
  %s6 = sld [smem:[#allocation0]]
  $region30: #{tpu_custom_call.1} parent=0
    _
  %s8 = ssub.s32 1, %s6
  %s9 = scalar_select 0, %s8, %s6
  $region1: #{tpu_custom_call.1} parent=0
    #allocation2 [shape = 'u8[8192]{0}', space=vmem, size = 0x2000, scoped, tag = 'output window, operand 0, single buffered']
    #allocation3 [shape = 's32[1]{0}', space=sflag, size = 0x4, scoped, tag = 'scoped memory for tpu_custom_call.1']
    #allocation4 [shape = 'u8[8192]{0}', space=vmem, size = 0x2000, scoped, tag = 'output window, operand 1, single buffered']
    #allocation5 [shape = 's32[1]{0}', space=sflag, size = 0x4, scoped, tag = 'scoped memory for tpu_custom_call.1']
    %10 = vsyncpa [#allocation3], 0
    %11 = vsyncpa [#allocation5], 0
    // Predicated region
    $region2: #{tpu_custom_call.1} parent=1 // pred_check
      _
    $region3: #{tpu_custom_call.1} parent=1 // pred_check_branch
      %13 = sbr.rel (0) target = $region5
    $region4: #{tpu_custom_call.1} parent=1 // pred_region
      _
    $region5: #{tpu_custom_call.1} parent=1 // pred_fallthru
      _
    // Predicated region
    $region6: #{tpu_custom_call.1} parent=1 // pred_check
      _
    $region7: #{tpu_custom_call.1} parent=1 // pred_check_branch
      %15 = sbr.rel (0) target = $region9
    $region8: #{tpu_custom_call.1} parent=1 // pred_region
      _
    $region9: #{tpu_custom_call.1} parent=1 // pred_fallthru
      _
    // Predicated region
    $region10: #{tpu_custom_call.1} parent=1 // pred_check
      _
    $region11: #{tpu_custom_call.1} parent=1 // pred_check_branch
      %17 = sbr.rel (0) target = $region13
    $region12: #{tpu_custom_call.1} parent=1 // pred_region
      _
    $region13: #{tpu_custom_call.1} parent=1 // pred_fallthru
      _
    %v18 = vld [vmem:[%s2] sm:$0x1]
    %v19 = vld [vmem:[%s2 + $0x4] sm:$0x1]
    %v20 = vld [vmem:[%s2 + $0x8] sm:$0x1]
    %v21 = vld [vmem:[%s2 + $0xc] sm:$0x1]
    %v22 = vld [vmem:[%s2 + $0x10] sm:$0x1]
    %v23 = vld [vmem:[%s2 + $0x14] sm:$0x1]
    %v24 = vld [vmem:[%s2 + $0x18] sm:$0x1]
    %v25 = vld [vmem:[%s2 + $0x1c] sm:$0x1]
    %v26 = vld [vmem:[%s2 + $0x1] sm:$0x1]
    %v27 = vld [vmem:[%s2 + $0x5] sm:$0x1]
    %v28 = vld [vmem:[%s2 + $0x9] sm:$0x1]
    %v29 = vld [vmem:[%s2 + $0xd] sm:$0x1]
    %v30 = vld [vmem:[%s2 + $0x11] sm:$0x1]
    %v31 = vld [vmem:[%s2 + $0x15] sm:$0x1]
    %v32 = vld [vmem:[%s2 + $0x19] sm:$0x1]
    %v33 = vld [vmem:[%s2 + $0x1d] sm:$0x1]
    %v34 = vld [vmem:[%s2 + $0x2] sm:$0x1]
    %v35 = vld [vmem:[%s2 + $0x6] sm:$0x1]
    %v36 = vld [vmem:[%s2 + $0xa] sm:$0x1]
    %v37 = vld [vmem:[%s2 + $0xe] sm:$0x1]
    %v38 = vld [vmem:[%s2 + $0x12] sm:$0x1]
    %v39 = vld [vmem:[%s2 + $0x16] sm:$0x1]
    %v40 = vld [vmem:[%s2 + $0x1a] sm:$0x1]
    %v41 = vld [vmem:[%s2 + $0x1e] sm:$0x1]
    %v42 = vld [vmem:[%s0] sm:$0x3]
    %v43 = vld [vmem:[%s0 + $0x2] sm:$0x3]
    %v44 = vld [vmem:[%s0 + $0x4] sm:$0x3]
    %v45 = vld [vmem:[%s0 + $0x6] sm:$0x3]
    %v46 = vld [vmem:[%s0 + $0x8] sm:$0x3]
    %v47 = vld [vmem:[%s0 + $0xa] sm:$0x3]
    %v48 = vld [vmem:[%s0 + $0xc] sm:$0x3]
    %v49 = vld [vmem:[%s0 + $0xe] sm:$0x3]
    %50 = vrot.lane.b32.xlu0 %v42, 16
    %v51 = vpop.permute.xlu0 %50
    %52 = vrot.lane.b32.xlu0 %v43, 16
    %v53 = vpop.permute.xlu0 %52
    %54 = vrot.lane.b32.xlu0 %v44, 16
    %v55 = vpop.permute.xlu0 %54
    %56 = vrot.lane.b32.xlu0 %v45, 16
    %v57 = vpop.permute.xlu0 %56
    %58 = vrot.lane.b32.xlu0 %v46, 16
    %v59 = vpop.permute.xlu0 %58
    %60 = vrot.lane.b32.xlu0 %v47, 16
    %v61 = vpop.permute.xlu0 %60
    %62 = vrot.lane.b32.xlu0 %v48, 16
    %v63 = vpop.permute.xlu0 %62
    %64 = vrot.lane.b32.xlu0 %v49, 16
    %v65 = vpop.permute.xlu0 %64
    %66 = vrot.lane.b32.xlu0 %v42, 112
    %v67 = vpop.permute.xlu0 %66
    %68 = vrot.lane.b32.xlu0 %v43, 112
    %v69 = vpop.permute.xlu0 %68
    %70 = vrot.lane.b32.xlu0 %v44, 112
    %v71 = vpop.permute.xlu0 %70
    %72 = vrot.lane.b32.xlu0 %v45, 112
    %v73 = vpop.permute.xlu0 %72
    %74 = vrot.lane.b32.xlu0 %v46, 112
    %v75 = vpop.permute.xlu0 %74
    %76 = vrot.lane.b32.xlu0 %v47, 112
    %v77 = vpop.permute.xlu0 %76
    %78 = vrot.lane.b32.xlu0 %v48, 112
    %v79 = vpop.permute.xlu0 %78
    %80 = vrot.lane.b32.xlu0 %v49, 112
    %v81 = vpop.permute.xlu0 %80
    %v82 = vlaneseq
    %v83 = vshrl.u32 %v82, 7
    %v84 = vsub.s32 0, %v83
    %v85 = vrot.slane %v18, %v84
    %v86 = vlaneseq
    %v87 = vshrl.u32 %v86, 7
    %v88 = vsub.s32 0, %v87
    %v89 = vrot.slane %v19, %v88
    %v90 = vlaneseq
    %v91 = vshrl.u32 %v90, 7
    %v92 = vsub.s32 0, %v91
    %v93 = vrot.slane %v20, %v92
    %v94 = vlaneseq
    %v95 = vshrl.u32 %v94, 7
    %v96 = vsub.s32 0, %v95
    %v97 = vrot.slane %v21, %v96
    %v98 = vlaneseq
    %v99 = vshrl.u32 %v98, 7
    %v100 = vsub.s32 0, %v99
    %v101 = vrot.slane %v22, %v100
    %v102 = vlaneseq
    %v103 = vshrl.u32 %v102, 7
    %v104 = vsub.s32 0, %v103
    %v105 = vrot.slane %v23, %v104
    %v106 = vlaneseq
    %v107 = vshrl.u32 %v106, 7
    %v108 = vsub.s32 0, %v107
    %v109 = vrot.slane %v24, %v108
    %v110 = vlaneseq
    %v111 = vshrl.u32 %v110, 7
    %v112 = vsub.s32 0, %v111
    %v113 = vrot.slane %v25, %v112
    %v114 = vmul.f32 %v42, %v85
    %v115 = vmul.f32 %v43, %v89
    %v116 = vmul.f32 %v44, %v93
    %v117 = vmul.f32 %v45, %v97
    %v118 = vmul.f32 %v46, %v101
    %v119 = vmul.f32 %v47, %v105
    %v120 = vmul.f32 %v48, %v109
    %v121 = vmul.f32 %v49, %v113
    %v122 = vlaneseq
    %v123 = vshrl.u32 %v122, 7
    %v124 = vsub.s32 0, %v123
    %v125 = vrot.slane %v26, %v124
    %v126 = vlaneseq
    %v127 = vshrl.u32 %v126, 7
    %v128 = vsub.s32 0, %v127
    %v129 = vrot.slane %v27, %v128
    %v130 = vlaneseq
    %v131 = vshrl.u32 %v130, 7
    %v132 = vsub.s32 0, %v131
    %v133 = vrot.slane %v28, %v132
    %v134 = vlaneseq
    %v135 = vshrl.u32 %v134, 7
    %v136 = vsub.s32 0, %v135
    %v137 = vrot.slane %v29, %v136
    %v138 = vlaneseq
    %v139 = vshrl.u32 %v138, 7
    %v140 = vsub.s32 0, %v139
    %v141 = vrot.slane %v30, %v140
    %v142 = vlaneseq
    %v143 = vshrl.u32 %v142, 7
    %v144 = vsub.s32 0, %v143
    %v145 = vrot.slane %v31, %v144
    %v146 = vlaneseq
    %v147 = vshrl.u32 %v146, 7
    %v148 = vsub.s32 0, %v147
    %v149 = vrot.slane %v32, %v148
    %v150 = vlaneseq
    %v151 = vshrl.u32 %v150, 7
    %v152 = vsub.s32 0, %v151
    %v153 = vrot.slane %v33, %v152
    %v154 = vmul.f32 %v67, %v125
    %v155 = vmul.f32 %v69, %v129
    %v156 = vmul.f32 %v71, %v133
    %v157 = vmul.f32 %v73, %v137
    %v158 = vmul.f32 %v75, %v141
    %v159 = vmul.f32 %v77, %v145
    %v160 = vmul.f32 %v79, %v149
    %v161 = vmul.f32 %v81, %v153
    %v162 = vadd.f32 %v114, %v154
    %v163 = vadd.f32 %v115, %v155
    %v164 = vadd.f32 %v116, %v156
    %v165 = vadd.f32 %v117, %v157
    %v166 = vadd.f32 %v118, %v158
    %v167 = vadd.f32 %v119, %v159
    %v168 = vadd.f32 %v120, %v160
    %v169 = vadd.f32 %v121, %v161
    %v170 = vlaneseq
    %v171 = vshrl.u32 %v170, 7
    %v172 = vsub.s32 0, %v171
    %v173 = vrot.slane %v34, %v172
    %v174 = vlaneseq
    %v175 = vshrl.u32 %v174, 7
    %v176 = vsub.s32 0, %v175
    %v177 = vrot.slane %v35, %v176
    %v178 = vlaneseq
    %v179 = vshrl.u32 %v178, 7
    %v180 = vsub.s32 0, %v179
    %v181 = vrot.slane %v36, %v180
    %v182 = vlaneseq
    %v183 = vshrl.u32 %v182, 7
    %v184 = vsub.s32 0, %v183
    %v185 = vrot.slane %v37, %v184
    %v186 = vlaneseq
    %v187 = vshrl.u32 %v186, 7
    %v188 = vsub.s32 0, %v187
    %v189 = vrot.slane %v38, %v188
    %v190 = vlaneseq
    %v191 = vshrl.u32 %v190, 7
    %v192 = vsub.s32 0, %v191
    %v193 = vrot.slane %v39, %v192
    %v194 = vlaneseq
    %v195 = vshrl.u32 %v194, 7
    %v196 = vsub.s32 0, %v195
    %v197 = vrot.slane %v40, %v196
    %v198 = vlaneseq
    %v199 = vshrl.u32 %v198, 7
    %v200 = vsub.s32 0, %v199
    %v201 = vrot.slane %v41, %v200
    %v202 = vmul.f32 %v51, %v173
    %v203 = vmul.f32 %v53, %v177
    %v204 = vmul.f32 %v55, %v181
    %v205 = vmul.f32 %v57, %v185
    %v206 = vmul.f32 %v59, %v189
    %v207 = vmul.f32 %v61, %v193
    %v208 = vmul.f32 %v63, %v197
    %v209 = vmul.f32 %v65, %v201
    %v210 = vadd.f32 %v162, %v202
    %v211 = vadd.f32 %v163, %v203
    %v212 = vadd.f32 %v164, %v204
    %v213 = vadd.f32 %v165, %v205
    %v214 = vadd.f32 %v166, %v206
    %v215 = vadd.f32 %v167, %v207
    %v216 = vadd.f32 %v168, %v208
    %v217 = vadd.f32 %v169, %v209
    %218 = vst [vmem:[#allocation2] sm:$0x3] %v210
    %219 = vst [vmem:[#allocation2 + $0x2] sm:$0x3] %v211
    %220 = vst [vmem:[#allocation2 + $0x4] sm:$0x3] %v212
    %221 = vst [vmem:[#allocation2 + $0x6] sm:$0x3] %v213
    %222 = vst [vmem:[#allocation2 + $0x8] sm:$0x3] %v214
    %223 = vst [vmem:[#allocation2 + $0xa] sm:$0x3] %v215
    %224 = vst [vmem:[#allocation2 + $0xc] sm:$0x3] %v216
    %225 = vst [vmem:[#allocation2 + $0xe] sm:$0x3] %v217
    %v226 = vld [vmem:[%s1] sm:$0x3]
    %v227 = vld [vmem:[%s1 + $0x2] sm:$0x3]
    %v228 = vld [vmem:[%s1 + $0x4] sm:$0x3]
    %v229 = vld [vmem:[%s1 + $0x6] sm:$0x3]
    %v230 = vld [vmem:[%s1 + $0x8] sm:$0x3]
    %v231 = vld [vmem:[%s1 + $0xa] sm:$0x3]
    %v232 = vld [vmem:[%s1 + $0xc] sm:$0x3]
    %v233 = vld [vmem:[%s1 + $0xe] sm:$0x3]
    %234 = vrot.lane.b32.xlu0 %v226, 16
    %v235 = vpop.permute.xlu0 %234
    %236 = vrot.lane.b32.xlu0 %v227, 16
    %v237 = vpop.permute.xlu0 %236
    %238 = vrot.lane.b32.xlu0 %v228, 16
    %v239 = vpop.permute.xlu0 %238
    %240 = vrot.lane.b32.xlu0 %v229, 16
    %v241 = vpop.permute.xlu0 %240
    %242 = vrot.lane.b32.xlu0 %v230, 16
    %v243 = vpop.permute.xlu0 %242
    %244 = vrot.lane.b32.xlu0 %v231, 16
    %v245 = vpop.permute.xlu0 %244
    %246 = vrot.lane.b32.xlu0 %v232, 16
    %v247 = vpop.permute.xlu0 %246
    %248 = vrot.lane.b32.xlu0 %v233, 16
    %v249 = vpop.permute.xlu0 %248
    %250 = vrot.lane.b32.xlu0 %v226, 112
    %v251 = vpop.permute.xlu0 %250
    %252 = vrot.lane.b32.xlu0 %v227, 112
    %v253 = vpop.permute.xlu0 %252
    %254 = vrot.lane.b32.xlu0 %v228, 112
    %v255 = vpop.permute.xlu0 %254
    %256 = vrot.lane.b32.xlu0 %v229, 112
    %v257 = vpop.permute.xlu0 %256
    %258 = vrot.lane.b32.xlu0 %v230, 112
    %v259 = vpop.permute.xlu0 %258
    %260 = vrot.lane.b32.xlu0 %v231, 112
    %v261 = vpop.permute.xlu0 %260
    %262 = vrot.lane.b32.xlu0 %v232, 112
    %v263 = vpop.permute.xlu0 %262
    %264 = vrot.lane.b32.xlu0 %v233, 112
    %v265 = vpop.permute.xlu0 %264
    %v266 = vmul.f32 %v226, %v85
    %v267 = vmul.f32 %v227, %v89
    %v268 = vmul.f32 %v228, %v93
    %v269 = vmul.f32 %v229, %v97
    %v270 = vmul.f32 %v230, %v101
    %v271 = vmul.f32 %v231, %v105
    %v272 = vmul.f32 %v232, %v109
    %v273 = vmul.f32 %v233, %v113
    %v274 = vmul.f32 %v251, %v125
    %v275 = vmul.f32 %v253, %v129
    %v276 = vmul.f32 %v255, %v133
    %v277 = vmul.f32 %v257, %v137
    %v278 = vmul.f32 %v259, %v141
    %v279 = vmul.f32 %v261, %v145
    %v280 = vmul.f32 %v263, %v149
    %v281 = vmul.f32 %v265, %v153
    %v282 = vadd.f32 %v266, %v274
    %v283 = vadd.f32 %v267, %v275
    %v284 = vadd.f32 %v268, %v276
    %v285 = vadd.f32 %v269, %v277
    %v286 = vadd.f32 %v270, %v278
    %v287 = vadd.f32 %v271, %v279
    %v288 = vadd.f32 %v272, %v280
    %v289 = vadd.f32 %v273, %v281
    %v290 = vmul.f32 %v235, %v173
    %v291 = vmul.f32 %v237, %v177
    %v292 = vmul.f32 %v239, %v181
    %v293 = vmul.f32 %v241, %v185
    %v294 = vmul.f32 %v243, %v189
    %v295 = vmul.f32 %v245, %v193
    %v296 = vmul.f32 %v247, %v197
    %v297 = vmul.f32 %v249, %v201
    %v298 = vadd.f32 %v282, %v290
    %v299 = vadd.f32 %v283, %v291
    %v300 = vadd.f32 %v284, %v292
    %v301 = vadd.f32 %v285, %v293
    %v302 = vadd.f32 %v286, %v294
    %v303 = vadd.f32 %v287, %v295
    %v304 = vadd.f32 %v288, %v296
    %v305 = vadd.f32 %v289, %v297
    %306 = vst [vmem:[#allocation4] sm:$0x3] %v298
    %307 = vst [vmem:[#allocation4 + $0x2] sm:$0x3] %v299
    %308 = vst [vmem:[#allocation4 + $0x4] sm:$0x3] %v300
    %309 = vst [vmem:[#allocation4 + $0x6] sm:$0x3] %v301
    %310 = vst [vmem:[#allocation4 + $0x8] sm:$0x3] %v302
    %311 = vst [vmem:[#allocation4 + $0xa] sm:$0x3] %v303
    %312 = vst [vmem:[#allocation4 + $0xc] sm:$0x3] %v304
    %313 = vst [vmem:[#allocation4 + $0xe] sm:$0x3] %v305
    // Predicated region
    $region14: #{tpu_custom_call.1} parent=1 // pred_check
      _
    $region15: #{tpu_custom_call.1} parent=1 // pred_check_branch
      %315 = sbr.rel (0) target = $region17
    $region16: #{tpu_custom_call.1} parent=1 // pred_region
      %s317 = ssub.s32 256, 256
      %318 = vsyncadd [#allocation3], %s317
      %s319 = sshll.u32 [#allocation2], 4
      %s320 = int_to_ptr.vmem [resolvable:$true] %s319
      %325 = dma.vmem_to_hbm [thread:$0]  %s320, 256, %s3, [#allocation3], 32, 32, 2
    $region17: #{tpu_custom_call.1} parent=1 // pred_fallthru
      _
    // Predicated region
    $region18: #{tpu_custom_call.1} parent=1 // pred_check
      _
    $region19: #{tpu_custom_call.1} parent=1 // pred_check_branch
      %327 = sbr.rel (0) target = $region21
    $region20: #{tpu_custom_call.1} parent=1 // pred_region
      %s329 = ssub.s32 256, 256
      %330 = vsyncadd [#allocation5], %s329
      %s331 = sshll.u32 [#allocation4], 4
      %s332 = int_to_ptr.vmem [resolvable:$true] %s331
      %337 = dma.vmem_to_hbm [thread:$0]  %s332, 256, %s4, [#allocation5], 32, 32, 2
    $region21: #{tpu_custom_call.1} parent=1 // pred_fallthru
      _
    // Predicated region
    $region22: #{tpu_custom_call.1} parent=1 // pred_check
      _
    $region23: #{tpu_custom_call.1} parent=1 // pred_check_branch
      %339 = sbr.rel (0) target = $region25
    $region24: #{tpu_custom_call.1} parent=1 // pred_region
      %340 = dma.done [#allocation3], 256
    $region25: #{tpu_custom_call.1} parent=1 // pred_fallthru
      _
    // Predicated region
    $region26: #{tpu_custom_call.1} parent=1 // pred_check
      _
    $region27: #{tpu_custom_call.1} parent=1 // pred_check_branch
      %342 = sbr.rel (0) target = $region29
    $region28: #{tpu_custom_call.1} parent=1 // pred_region
      %343 = dma.done [#allocation5], 256
    $region29: #{tpu_custom_call.1} parent=1 // pred_fallthru
      _
    %344 = vsyncpa [#allocation3], 1
    %345 = vsyncpa [#allocation5], 1

</llo_original>
